<compile_context>
chip_gen: v7x
topology: tpu7x:2x2x1
jax: 0.10.0
libtpu: 0.0.40
codegen_flags: <defaults>
</compile_context>

<pallas_src>
import functools

import jax
import jax.numpy as jnp
from jax.experimental import pallas as pl
from jax.experimental.pallas import tpu as pltpu

_LANE = 128      # lane width  (last dim)
_SUBLANE = 8     # sublane width (second-to-last dim)
_MAX_BATCH_TILE = 256


def _round_up(x, m):
    return (x + m - 1) // m * m


def _fused_mlp_kernel(*refs, num_layers):
    """Fused MLP: h = x; repeat num_layers times: h = relu(h @ W_l + b_l).

    refs layout: (x_ref, w0_ref, b0_ref, w1_ref, b1_ref, ..., o_ref)
      x_ref : [TB, IN_pad]      (VMEM)
      w_ref : [IN_pad, OUT_pad] (VMEM, pre-transposed, zero padded)
      b_ref : [1, OUT_pad]      (VMEM)
      o_ref : [TB, OUT_pad]     (VMEM)
    Activations stay on-chip for the whole stack (no HBM round trips).
    """
    x_ref = refs[0]
    o_ref = refs[-1]
    h = x_ref[...]
    for layer in range(num_layers):               # statically unrolled
        w = refs[1 + 2 * layer][...]
        b = refs[2 + 2 * layer][...]
        lhs = h.astype(w.dtype) if h.dtype != w.dtype else h
        y = jnp.dot(lhs, w, preferred_element_type=jnp.float32) + b
        h = jnp.maximum(y, 0.0)                   # ReLU after every Linear
    o_ref[...] = h.astype(o_ref.dtype)


def prepare_mlp_params(params, weight_dtype=jnp.float32):
    """One-time prep: transpose PyTorch-layout weights ([out,in] -> [in,out]),
    zero-pad every feature dim to a multiple of 128, pre-shape biases to
    [1, out_pad]. Done once, so no per-forward transpose/reshape HBM traffic.
    """
    prepared = []
    for (w, b) in params:
        out_f, in_f = w.shape
        in_pad = _round_up(in_f, _LANE)
        out_pad = _round_up(out_f, _LANE)
        w_p = jnp.zeros((in_pad, out_pad), jnp.float32).at[:in_f, :out_f].set(w.T)
        b_p = jnp.zeros((1, out_pad), jnp.float32).at[0, :out_f].set(b)
        prepared.append((w_p.astype(weight_dtype), b_p.astype(jnp.float32)))
    return prepared


def _fused_mlp_call(x_pad, prepared_params, batch_tile):
    B_pad, in_pad = x_pad.shape
    out_pad = prepared_params[-1][0].shape[1]
    num_layers = len(prepared_params)

    in_specs = [pl.BlockSpec((batch_tile, in_pad), lambda i: (i, 0))]
    flat_inputs = [x_pad]
    for (w, b) in prepared_params:
        in_specs.append(pl.BlockSpec(w.shape, lambda i: (0, 0)))
        in_specs.append(pl.BlockSpec(b.shape, lambda i: (0, 0)))
        flat_inputs += [w, b]

    kernel = functools.partial(_fused_mlp_kernel, num_layers=num_layers)

    return pl.pallas_call(
        kernel,
        out_shape=jax.ShapeDtypeStruct((B_pad, out_pad), jnp.float32),
        grid_spec=pltpu.PrefetchScalarGridSpec(
            num_scalar_prefetch=0,
            grid=(B_pad // batch_tile,),
            in_specs=in_specs,
            out_specs=pl.BlockSpec((batch_tile, out_pad), lambda i: (i, 0)),
        ),
        compiler_params=pltpu.CompilerParams(
            # Batch axis is independent -> shard across TensorCores on v7x.
            dimension_semantics=("parallel",),
        ),
    )(*flat_inputs)


def make_mlp_forward(params, weight_dtype=jnp.float32):
    """Build a jitted forward matching MLP.forward (activation_fn = nn.ReLU).

    params: list of (weight [out,in], bias [out]) in PyTorch layout.
    """
    prepared = prepare_mlp_params(params, weight_dtype=weight_dtype)
    in_pad = prepared[0][0].shape[0]
    out_features = params[-1][0].shape[0]

    @jax.jit
    def forward(states, actions=None):
        x = states if actions is None else jnp.concatenate([states, actions], axis=-1)
        B, in_f = x.shape
        # Pad batch to a sublane multiple; tile it (amortizes launch overhead
        # and lets megacore shard large batches).
        b_pad = _round_up(max(B, _SUBLANE), _SUBLANE)
        batch_tile = _MAX_BATCH_TILE if b_pad >= _MAX_BATCH_TILE else b_pad
        b_pad = _round_up(b_pad, batch_tile)
        x_pad = jnp.zeros((b_pad, in_pad), jnp.float32).at[:B, :in_f].set(x)
        y_pad = _fused_mlp_call(x_pad, prepared, batch_tile)
        return y_pad[:B, :out_features]

    return forward


def init_mlp_params(key, input_size, hidden_sizes):
    """Deterministic init matching nn.Linear shapes (weight: [out, in])."""
    input_sizes = [input_size] + list(hidden_sizes[:-1])
    params = []
    for fan_in, fan_out in zip(input_sizes, hidden_sizes):
        key, wk, bk = jax.random.split(key, 3)
        bound = 1.0 / jnp.sqrt(fan_in)
        w = jax.random.uniform(wk, (fan_out, fan_in), jnp.float32, -bound, bound)
        b = jax.random.uniform(bk, (fan_out,), jnp.float32, -bound, bound)
        params.append((w, b))
    return params


if __name__ == "__main__":
    key = jax.random.PRNGKey(0)

    batch = 8
    state_dim = 24
    action_dim = 8
    input_size = state_dim + action_dim      # 32
    hidden_sizes = [32, 32]

    pkey, skey, akey = jax.random.split(key, 3)
    params = init_mlp_params(pkey, input_size, hidden_sizes)

    states = jax.random.normal(skey, (batch, state_dim), jnp.float32)
    actions = jax.random.normal(akey, (batch, action_dim), jnp.float32)

    mlp_forward = make_mlp_forward(params)   # f32 weights at these tiny sizes
    out = mlp_forward(states, actions)
    jax.block_until_ready(out)

    # Pure-JAX reference (ReLU after every Linear, as in the nn.Sequential spec).
    x_ref = jnp.concatenate([states, actions], axis=-1)
    for (w, b) in params:
        x_ref = jnp.maximum(x_ref @ w.T + b, 0.0)

    assert out.shape == (batch, hidden_sizes[-1])
    assert jnp.allclose(out, x_ref, atol=1e-4, rtol=1e-4)

    print("KERNEL_OK")
</pallas_src>

<mosaic_0001>
module attributes {stable_mosaic.version = 11 : i64} {
  func.func @_fused_mlp_kernel(%arg0: i32, %arg1: memref<8x128xf32, #tpu.memory_space<vmem>>, %arg2: memref<128x128xf32, #tpu.memory_space<vmem>>, %arg3: memref<1x128xf32, #tpu.memory_space<vmem>>, %arg4: memref<128x128xf32, #tpu.memory_space<vmem>>, %arg5: memref<1x128xf32, #tpu.memory_space<vmem>>, %arg6: memref<8x128xf32, #tpu.memory_space<vmem>>) attributes {dimension_semantics = [#tpu.dimension_semantics<parallel>], iteration_bounds = array<i64: 1>, scalar_prefetch = 0 : i64, scratch_operands = 0 : i64, tpu.core_type = #tpu.core_type<tc>, window_params = [{transform_indices = @transform_0, window_bounds = array<i64: 8, 128>}, {pipeline_mode = #tpu.pipeline_mode<synchronous>, transform_indices = @transform_1, window_bounds = array<i64: 128, 128>}, {pipeline_mode = #tpu.pipeline_mode<synchronous>, transform_indices = @transform_2, window_bounds = array<i64: 1, 128>}, {pipeline_mode = #tpu.pipeline_mode<synchronous>, transform_indices = @transform_3, window_bounds = array<i64: 128, 128>}, {pipeline_mode = #tpu.pipeline_mode<synchronous>, transform_indices = @transform_4, window_bounds = array<i64: 1, 128>}, {transform_indices = @transform_5, window_bounds = array<i64: 8, 128>}]} {
    %c0 = arith.constant 0 : index
    %c0_0 = arith.constant 0 : index
    %0 = vector.load %arg1[%c0, %c0_0] : memref<8x128xf32, #tpu.memory_space<vmem>>, vector<8x128xf32>
    %c0_1 = arith.constant 0 : index
    %c0_2 = arith.constant 0 : index
    %1 = vector.load %arg2[%c0_1, %c0_2] : memref<128x128xf32, #tpu.memory_space<vmem>>, vector<128x128xf32>
    %c0_3 = arith.constant 0 : index
    %c0_4 = arith.constant 0 : index
    %2 = vector.load %arg3[%c0_3, %c0_4] : memref<1x128xf32, #tpu.memory_space<vmem>>, vector<1x128xf32>
    %cst = arith.constant dense<0.000000e+00> : vector<8x128xf32>
    %3 = tpu.matmul %0, %1, %cst {dimension_numbers = #tpu.dot_dimension_numbers<[1], [0], [0], [1], [0, 0, 1, 1], [], []>} : vector<8x128xf32>, vector<128x128xf32>, vector<8x128xf32> -> vector<8x128xf32>
    %4 = vector.broadcast %2 : vector<1x128xf32> to vector<8x128xf32>
    %5 = arith.addf %3, %4 : vector<8x128xf32>
    %cst_5 = arith.constant 0.000000e+00 : f32
    %6 = vector.broadcast %cst_5 : f32 to vector<8x128xf32>
    %7 = arith.maximumf %5, %6 : vector<8x128xf32>
    %c0_6 = arith.constant 0 : index
    %c0_7 = arith.constant 0 : index
    %8 = vector.load %arg4[%c0_6, %c0_7] : memref<128x128xf32, #tpu.memory_space<vmem>>, vector<128x128xf32>
    %c0_8 = arith.constant 0 : index
    %c0_9 = arith.constant 0 : index
    %9 = vector.load %arg5[%c0_8, %c0_9] : memref<1x128xf32, #tpu.memory_space<vmem>>, vector<1x128xf32>
    %cst_10 = arith.constant dense<0.000000e+00> : vector<8x128xf32>
    %10 = tpu.matmul %7, %8, %cst_10 {dimension_numbers = #tpu.dot_dimension_numbers<[1], [0], [0], [1], [0, 0, 1, 1], [], []>} : vector<8x128xf32>, vector<128x128xf32>, vector<8x128xf32> -> vector<8x128xf32>
    %11 = vector.broadcast %9 : vector<1x128xf32> to vector<8x128xf32>
    %12 = arith.addf %10, %11 : vector<8x128xf32>
    %cst_11 = arith.constant 0.000000e+00 : f32
    %13 = vector.broadcast %cst_11 : f32 to vector<8x128xf32>
    %14 = arith.maximumf %12, %13 : vector<8x128xf32>
    %c0_12 = arith.constant 0 : index
    %c0_13 = arith.constant 0 : index
    %15 = vector.load %arg6[%c0_12, %c0_13] : memref<8x128xf32, #tpu.memory_space<vmem>>, vector<8x128xf32>
    tpu.vector_store %arg6[%c0_12, %c0_13], %14 {strides = array<i32>} : memref<8x128xf32, #tpu.memory_space<vmem>>, vector<8x128xf32>,
    return
  }
  func.func @transform_0(%arg0: i32) -> (i32, i32) {
    %c0_i32 = arith.constant 0 : i32
    %c0_i32_0 = arith.constant 0 : i32
    return %arg0, %c0_i32 : i32, i32
  }
  func.func @transform_1(%arg0: i32) -> (i32, i32) {
    %c0_i32 = arith.constant 0 : i32
    %c0_i32_0 = arith.constant 0 : i32
    %c0_i32_1 = arith.constant 0 : i32
    return %c0_i32, %c0_i32_0 : i32, i32
  }
  func.func @transform_2(%arg0: i32) -> (i32, i32) {
    %c0_i32 = arith.constant 0 : i32
    %c0_i32_0 = arith.constant 0 : i32
    %c0_i32_1 = arith.constant 0 : i32
    return %c0_i32, %c0_i32_0 : i32, i32
  }
  func.func @transform_3(%arg0: i32) -> (i32, i32) {
    %c0_i32 = arith.constant 0 : i32
    %c0_i32_0 = arith.constant 0 : i32
    %c0_i32_1 = arith.constant 0 : i32
    return %c0_i32, %c0_i32_0 : i32, i32
  }
  func.func @transform_4(%arg0: i32) -> (i32, i32) {
    %c0_i32 = arith.constant 0 : i32
    %c0_i32_0 = arith.constant 0 : i32
    %c0_i32_1 = arith.constant 0 : i32
    return %c0_i32, %c0_i32_0 : i32, i32
  }
  func.func @transform_5(%arg0: i32) -> (i32, i32) {
    %c0_i32 = arith.constant 0 : i32
    %c0_i32_0 = arith.constant 0 : i32
    return %arg0, %c0_i32 : i32, i32
  }
}

</mosaic_0001>

<llo_original>
// kernel: forward.1
$region0: #{forward.1}
  #allocation0 [shape = 'u32[]', space=smem, size = 0x4, offset = 0x4, fixed_abs, tag = 'smem constant byte address 0x4 - core index']
  #allocation1 [shape = 'u32[144,128]{1,0:T(1,128)}', space=vmem, size = 0x12000, scoped, tag = 'internal scratch']
  %s0 = inlined_call_operand.vmem [shape: f32[8,128], index: 0, kind: input, shape index: {}]
  %s1 = inlined_call_operand.hbm [shape: f32[128,128], index: 1, kind: input, shape index: {}]
  %s2 = inlined_call_operand.vmem [shape: f32[1,128], index: 2, kind: input, shape index: {}]
  %s3 = inlined_call_operand.hbm [shape: f32[128,128], index: 3, kind: input, shape index: {}]
  %s4 = inlined_call_operand.vmem [shape: f32[1,128], index: 4, kind: input, shape index: {}]
  %s5 = inlined_call_operand.hbm [shape: f32[8,128], index: 5, kind: output, shape index: {}]
  %s6 = sld [smem:[#allocation0]]
  $region38: #{forward.1} parent=0
    _
  %s8 = ssub.s32 1, %s6
  %s9 = scalar_select 0, %s8, %s6
  $region1: #{forward.1} parent=0
    #allocation2 [shape = 'u8[65536]{0}', space=vmem, size = 0x10000, scoped, tag = 'input window, operand 1, single buffered']
    #allocation3 [shape = 's32[1]{0}', space=sflag, size = 0x4, scoped, tag = 'scoped memory for forward.1']
    #allocation4 [shape = 's32[1]{0}', space=sflag, size = 0x4, scoped, tag = 'scoped memory for forward.1']
    #allocation5 [shape = 'u8[65536]{0}', space=vmem, size = 0x10000, scoped, tag = 'input window, operand 3, single buffered']
    #allocation6 [shape = 's32[1]{0}', space=sflag, size = 0x4, scoped, tag = 'scoped memory for forward.1']
    #allocation7 [shape = 'u8[4096]{0}', space=vmem, size = 0x1000, scoped, tag = 'output window, operand 0, single buffered']
    %10 = vsyncpa [#allocation3], 0
    %11 = vsyncpa [#allocation6], 0
    %12 = vsyncpa [#allocation4], 0
    // Predicated region
    $region2: #{forward.1} parent=1 // pred_check
      _
    $region3: #{forward.1} parent=1 // pred_check_branch
      %14 = sbr.rel (0) target = $region5
    $region4: #{forward.1} parent=1 // pred_region
      _
    $region5: #{forward.1} parent=1 // pred_fallthru
      _
    // Predicated region
    $region6: #{forward.1} parent=1 // pred_check
      _
    $region7: #{forward.1} parent=1 // pred_check_branch
      %16 = sbr.rel (0) target = $region9
    $region8: #{forward.1} parent=1 // pred_region
      %s18 = ssub.s32 2048, 2048
      %19 = vsyncadd [#allocation3], %s18
      %s20 = sshll.u32 [#allocation2], 4
      %s21 = int_to_ptr.vmem [resolvable:$true] %s20
      %26 = dma.hbm_to_vmem [thread:$0]  %s1, 2048, %s21, [#allocation3], 128, 128, 8
    $region9: #{forward.1} parent=1 // pred_fallthru
      _
    // Predicated region
    $region10: #{forward.1} parent=1 // pred_check
      _
    $region11: #{forward.1} parent=1 // pred_check_branch
      %28 = sbr.rel (0) target = $region13
    $region12: #{forward.1} parent=1 // pred_region
      _
    $region13: #{forward.1} parent=1 // pred_fallthru
      _
    // Predicated region
    $region14: #{forward.1} parent=1 // pred_check
      _
    $region15: #{forward.1} parent=1 // pred_check_branch
      %30 = sbr.rel (0) target = $region17
    $region16: #{forward.1} parent=1 // pred_region
      %s32 = ssub.s32 2048, 2048
      %33 = vsyncadd [#allocation6], %s32
      %s34 = sshll.u32 [#allocation5], 4
      %s35 = int_to_ptr.vmem [resolvable:$true] %s34
      %40 = dma.hbm_to_vmem [thread:$0]  %s3, 2048, %s35, [#allocation6], 128, 128, 8
    $region17: #{forward.1} parent=1 // pred_fallthru
      _
    // Predicated region
    $region18: #{forward.1} parent=1 // pred_check
      _
    $region19: #{forward.1} parent=1 // pred_check_branch
      %42 = sbr.rel (0) target = $region21
    $region20: #{forward.1} parent=1 // pred_region
      _
    $region21: #{forward.1} parent=1 // pred_fallthru
      _
    // Predicated region
    $region22: #{forward.1} parent=1 // pred_check
      _
    $region23: #{forward.1} parent=1 // pred_check_branch
      %44 = sbr.rel (0) target = $region25
    $region24: #{forward.1} parent=1 // pred_region
      %45 = dma.done [#allocation3], 2048
    $region25: #{forward.1} parent=1 // pred_fallthru
      _
    // Predicated region
    $region26: #{forward.1} parent=1 // pred_check
      _
    $region27: #{forward.1} parent=1 // pred_check_branch
      %47 = sbr.rel (0) target = $region29
    $region28: #{forward.1} parent=1 // pred_region
      %48 = dma.done [#allocation6], 2048
    $region29: #{forward.1} parent=1 // pred_fallthru
      _
    %v49 = vld [vmem:[%s0] sm:$0xff]
    %v50 = vld [vmem:[#allocation2] sm:$0xff]
    %v51 = vld [vmem:[#allocation2 + $0x8] sm:$0xff]
    %v52 = vld [vmem:[#allocation2 + $0x10] sm:$0xff]
    %v53 = vld [vmem:[#allocation2 + $0x18] sm:$0xff]
    %v54 = vld [vmem:[#allocation2 + $0x20] sm:$0xff]
    %v55 = vld [vmem:[#allocation2 + $0x28] sm:$0xff]
    %v56 = vld [vmem:[#allocation2 + $0x30] sm:$0xff]
    %v57 = vld [vmem:[#allocation2 + $0x38] sm:$0xff]
    %v58 = vld [vmem:[#allocation2 + $0x40] sm:$0xff]
    %v59 = vld [vmem:[#allocation2 + $0x48] sm:$0xff]
    %v60 = vld [vmem:[#allocation2 + $0x50] sm:$0xff]
    %v61 = vld [vmem:[#allocation2 + $0x58] sm:$0xff]
    %v62 = vld [vmem:[#allocation2 + $0x60] sm:$0xff]
    %v63 = vld [vmem:[#allocation2 + $0x68] sm:$0xff]
    %v64 = vld [vmem:[#allocation2 + $0x70] sm:$0xff]
    %v65 = vld [vmem:[#allocation2 + $0x78] sm:$0xff]
    %v66 = vld [vmem:[%s2] sm:$0x1]
    %v68 = vlaneseq
    %v69 = vshrl.u32 %v68, 7
    %v70 = vsub.s32 0, %v69
    %v71 = vrot.slane %v66, %v70
    %73 = vmatprep.subr.mxu0 0.0
    %74 = vmatpush1.msra.mxu0 %v50
    %75 = vmatprep.subr.mxu0 0.0
    %76 = vmatpush1.msra.mxu0 %v51
    %77 = vmatprep.subr.mxu0 0.0
    %78 = vmatpush1.msra.mxu0 %v52
    %79 = vmatprep.subr.mxu0 0.0
    %80 = vmatpush1.msra.mxu0 %v53
    %81 = vmatprep.subr.mxu0 0.0
    %82 = vmatpush1.msra.mxu0 %v54
    %83 = vmatprep.subr.mxu0 0.0
    %84 = vmatpush1.msra.mxu0 %v55
    %85 = vmatprep.subr.mxu0 0.0
    %86 = vmatpush1.msra.mxu0 %v56
    %87 = vmatprep.subr.mxu0 0.0
    %88 = vmatpush1.msra.mxu0 %v57
    %89 = vmatprep.subr.mxu0 0.0
    %90 = vmatpush1.msra.mxu0 %v58
    %91 = vmatprep.subr.mxu0 0.0
    %92 = vmatpush1.msra.mxu0 %v59
    %93 = vmatprep.subr.mxu0 0.0
    %94 = vmatpush1.msra.mxu0 %v60
    %95 = vmatprep.subr.mxu0 0.0
    %96 = vmatpush1.msra.mxu0 %v61
    %97 = vmatprep.subr.mxu0 0.0
    %98 = vmatpush1.msra.mxu0 %v62
    %99 = vmatprep.subr.mxu0 0.0
    %100 = vmatpush1.msra.mxu0 %v63
    %101 = vmatprep.subr.mxu0 0.0
    %102 = vmatpush1.msra.mxu0 %v64
    %103 = vmatprep.subr.mxu0 0.0
    %104 = vmatpush1.msra.mxu0 %v65
    %105 = vmatprep.subr.mxu0 0.0
    %106 = vmatpush1.msra.mxu0 0.0
    %107 = vmatprep.subr.mxu0 0.0
    %108 = vmatpush1.msra.mxu0 0.0
    %109 = vmatprep.subr.mxu0 0.0
    %110 = vmatpush1.msra.mxu0 0.0
    %111 = vmatprep.subr.mxu0 0.0
    %112 = vmatpush1.msra.mxu0 0.0
    %113 = vmatprep.subr.mxu0 0.0
    %114 = vmatpush1.msra.mxu0 0.0
    %115 = vmatprep.subr.mxu0 0.0
    %116 = vmatpush1.msra.mxu0 0.0
    %117 = vmatprep.subr.mxu0 0.0
    %118 = vmatpush1.msra.mxu0 0.0
    %119 = vmatprep.subr.mxu0 0.0
    %120 = vmatpush1.msra.mxu0 0.0
    %121 = vmatprep.subr.mxu0 0.0
    %122 = vmatpush1.msra.mxu0 0.0
    %123 = vmatprep.subr.mxu0 0.0
    %124 = vmatpush1.msra.mxu0 0.0
    %125 = vmatprep.subr.mxu0 0.0
    %126 = vmatpush1.msra.mxu0 0.0
    %127 = vmatprep.subr.mxu0 0.0
    %128 = vmatpush1.msra.mxu0 0.0
    %129 = vmatprep.subr.mxu0 0.0
    %130 = vmatpush1.msra.mxu0 0.0
    %131 = vmatprep.subr.mxu0 0.0
    %132 = vmatpush1.msra.mxu0 0.0
    %133 = vmatprep.subr.mxu0 0.0
    %134 = vmatpush1.msra.mxu0 0.0
    %135 = vmatprep.subr.mxu0 0.0
    %136 = vmatpush1.msra.mxu0 0.0
    %137 = vmatprep.mubr.f32.mxu0 0.0
    %138 = vmatmul.mubr.f32.gmra.mrb[0].mxu0 %v49
    %v139 = vpop.f32.mrb[0].mxu0
    %v140 = vadd.f32 %v71, %v139
    %v141 = vpop.f32.mrb[0].mxu0
    %142 = vdwg.mxu0
    %v143 = vmax.f32 %v140, 0.0
    %v144 = vld [vmem:[#allocation5] sm:$0xff]
    %v145 = vld [vmem:[#allocation5 + $0x8] sm:$0xff]
    %v146 = vld [vmem:[#allocation5 + $0x10] sm:$0xff]
    %v147 = vld [vmem:[#allocation5 + $0x18] sm:$0xff]
    %v148 = vld [vmem:[#allocation5 + $0x20] sm:$0xff]
    %v149 = vld [vmem:[#allocation5 + $0x28] sm:$0xff]
    %v150 = vld [vmem:[#allocation5 + $0x30] sm:$0xff]
    %v151 = vld [vmem:[#allocation5 + $0x38] sm:$0xff]
    %v152 = vld [vmem:[#allocation5 + $0x40] sm:$0xff]
    %v153 = vld [vmem:[#allocation5 + $0x48] sm:$0xff]
    %v154 = vld [vmem:[#allocation5 + $0x50] sm:$0xff]
    %v155 = vld [vmem:[#allocation5 + $0x58] sm:$0xff]
    %v156 = vld [vmem:[#allocation5 + $0x60] sm:$0xff]
    %v157 = vld [vmem:[#allocation5 + $0x68] sm:$0xff]
    %v158 = vld [vmem:[#allocation5 + $0x70] sm:$0xff]
    %v159 = vld [vmem:[#allocation5 + $0x78] sm:$0xff]
    %v160 = vld [vmem:[%s4] sm:$0x1]
    %v162 = vlaneseq
    %v163 = vshrl.u32 %v162, 7
    %v164 = vsub.s32 0, %v163
    %v165 = vrot.slane %v160, %v164
    %167 = vmatprep.subr.mxu0 0.0
    %168 = vmatpush1.msra.mxu0 %v144
    %169 = vmatprep.subr.mxu0 0.0
    %170 = vmatpush1.msra.mxu0 %v145
    %171 = vmatprep.subr.mxu0 0.0
    %172 = vmatpush1.msra.mxu0 %v146
    %173 = vmatprep.subr.mxu0 0.0
    %174 = vmatpush1.msra.mxu0 %v147
    %175 = vmatprep.subr.mxu0 0.0
    %176 = vmatpush1.msra.mxu0 %v148
    %177 = vmatprep.subr.mxu0 0.0
    %178 = vmatpush1.msra.mxu0 %v149
    %179 = vmatprep.subr.mxu0 0.0
    %180 = vmatpush1.msra.mxu0 %v150
    %181 = vmatprep.subr.mxu0 0.0
    %182 = vmatpush1.msra.mxu0 %v151
    %183 = vmatprep.subr.mxu0 0.0
    %184 = vmatpush1.msra.mxu0 %v152
    %185 = vmatprep.subr.mxu0 0.0
    %186 = vmatpush1.msra.mxu0 %v153
    %187 = vmatprep.subr.mxu0 0.0
    %188 = vmatpush1.msra.mxu0 %v154
    %189 = vmatprep.subr.mxu0 0.0
    %190 = vmatpush1.msra.mxu0 %v155
    %191 = vmatprep.subr.mxu0 0.0
    %192 = vmatpush1.msra.mxu0 %v156
    %193 = vmatprep.subr.mxu0 0.0
    %194 = vmatpush1.msra.mxu0 %v157
    %195 = vmatprep.subr.mxu0 0.0
    %196 = vmatpush1.msra.mxu0 %v158
    %197 = vmatprep.subr.mxu0 0.0
    %198 = vmatpush1.msra.mxu0 %v159
    %199 = vmatprep.subr.mxu0 0.0
    %200 = vmatpush1.msra.mxu0 0.0
    %201 = vmatprep.subr.mxu0 0.0
    %202 = vmatpush1.msra.mxu0 0.0
    %203 = vmatprep.subr.mxu0 0.0
    %204 = vmatpush1.msra.mxu0 0.0
    %205 = vmatprep.subr.mxu0 0.0
    %206 = vmatpush1.msra.mxu0 0.0
    %207 = vmatprep.subr.mxu0 0.0
    %208 = vmatpush1.msra.mxu0 0.0
    %209 = vmatprep.subr.mxu0 0.0
    %210 = vmatpush1.msra.mxu0 0.0
    %211 = vmatprep.subr.mxu0 0.0
    %212 = vmatpush1.msra.mxu0 0.0
    %213 = vmatprep.subr.mxu0 0.0
    %214 = vmatpush1.msra.mxu0 0.0
    %215 = vmatprep.subr.mxu0 0.0
    %216 = vmatpush1.msra.mxu0 0.0
    %217 = vmatprep.subr.mxu0 0.0
    %218 = vmatpush1.msra.mxu0 0.0
    %219 = vmatprep.subr.mxu0 0.0
    %220 = vmatpush1.msra.mxu0 0.0
    %221 = vmatprep.subr.mxu0 0.0
    %222 = vmatpush1.msra.mxu0 0.0
    %223 = vmatprep.subr.mxu0 0.0
    %224 = vmatpush1.msra.mxu0 0.0
    %225 = vmatprep.subr.mxu0 0.0
    %226 = vmatpush1.msra.mxu0 0.0
    %227 = vmatprep.subr.mxu0 0.0
    %228 = vmatpush1.msra.mxu0 0.0
    %229 = vmatprep.subr.mxu0 0.0
    %230 = vmatpush1.msra.mxu0 0.0
    %231 = vmatprep.mubr.f32.mxu0 0.0
    %232 = vmatmul.mubr.f32.gmra.mrb[0].mxu0 %v143
    %v233 = vpop.f32.mrb[0].mxu0
    %v234 = vadd.f32 %v165, %v233
    %v235 = vpop.f32.mrb[0].mxu0
    %236 = vdwg.mxu0
    %v237 = vmax.f32 %v234, 0.0
    %238 = vst [vmem:[#allocation7] sm:$0xff] %v237
    // Predicated region
    $region30: #{forward.1} parent=1 // pred_check
      _
    $region31: #{forward.1} parent=1 // pred_check_branch
      %240 = sbr.rel (0) target = $region33
    $region32: #{forward.1} parent=1 // pred_region
      %s242 = ssub.s32 128, 128
      %243 = vsyncadd [#allocation4], %s242
      %s245 = sshll.u32 [#allocation7], 4
      %s246 = int_to_ptr.vmem [resolvable:$true] %s245
      %248 = dma.vmem_to_hbm [thread:$0]  %s246, 128, %s5, [#allocation4]
    $region33: #{forward.1} parent=1 // pred_fallthru
      _
    // Predicated region
    $region34: #{forward.1} parent=1 // pred_check
      _
    $region35: #{forward.1} parent=1 // pred_check_branch
      %250 = sbr.rel (0) target = $region37
    $region36: #{forward.1} parent=1 // pred_region
      %251 = dma.done [#allocation4], 128
    $region37: #{forward.1} parent=1 // pred_fallthru
      _
    %252 = vsyncpa [#allocation3], 1
    %253 = vsyncpa [#allocation6], 1
    %254 = vsyncpa [#allocation4], 1

</llo_original>
